<compile_context>
chip_gen: v5e
topology: v5e:2x2
jax: 0.10.0
libtpu: 0.0.40
codegen_flags: <defaults>
</compile_context>

<pallas_src>
import jax
import jax.numpy as jnp
from jax.experimental import pallas as pl
from jax.experimental.pallas import tpu as pltpu

LANES = 128
_BLOCK_BYTES = 6 * 1024 * 1024        # ~6 MiB logical per block (in + out double-buffered = 24 MiB)
_VMEM_LIMIT_BYTES = 40 * 1024 * 1024  # explicit scoped-VMEM cap: safe headroom on v5e/v6e/v7x
_TAIL_MAX_LANES = 64 * 1024           # lane-tile cap for the rare (1, n) remainder path


def _swish_kernel(x_ref, o_ref):
    # Compute in f32 on the VPU/EUP; the kernel is HBM-bound so the upcast is hidden slack.
    xf = x_ref[...].astype(jnp.float32)
    # Single-transcendental sigmoid: sigmoid(x) = 0.5 * (1 + tanh(x / 2)).
    sig = 0.5 * (jnp.tanh(0.5 * xf) + 1.0)
    o_ref[...] = (xf * sig).astype(o_ref.dtype)


def _sublane_min(dtype):
    # 32-bit -> 8 sublanes, 16-bit -> 16, 8-bit -> 32 (packed dtypes pack along sublanes).
    itemsize = jnp.dtype(dtype).itemsize
    return max(8, 32 // itemsize)


def _round_up(a, b):
    return ((a + b - 1) // b) * b


def _compiler_params():
    return pltpu.CompilerParams(
        dimension_semantics=("parallel",),
        vmem_limit_bytes=_VMEM_LIMIT_BYTES,
    )


def _swish_2d(x2d, tile_rows):
    rows, _ = x2d.shape
    grid = (pl.cdiv(rows, tile_rows),)
    return pl.pallas_call(
        _swish_kernel,
        out_shape=jax.ShapeDtypeStruct(x2d.shape, x2d.dtype),
        grid=grid,
        in_specs=[pl.BlockSpec((tile_rows, LANES), lambda i: (i, 0))],
        out_specs=pl.BlockSpec((tile_rows, LANES), lambda i: (i, 0)),
        compiler_params=_compiler_params(),
    )(x2d)


def _swish_tail(x1d):
    # Lane-remainder fallback: view as (1, n), tile along lanes (multiples of 128),
    # let Pallas mask the partial last block.  No pad / slice => no extra HBM passes.
    # Vreg utilization is lower on this path, but it is only taken for tensors whose
    # total size isn't a multiple of 128 (rare, and typically small).
    n = x1d.shape[0]
    dtype = x1d.dtype
    itemsize = jnp.dtype(dtype).itemsize
    budget_lanes = max(LANES, (_BLOCK_BYTES // itemsize) // LANES * LANES)
    lane_tile = min(budget_lanes, _TAIL_MAX_LANES, _round_up(n, LANES))
    x2d = x1d.reshape(1, n)
    out2d = pl.pallas_call(
        _swish_kernel,
        out_shape=jax.ShapeDtypeStruct((1, n), dtype),
        grid=(pl.cdiv(n, lane_tile),),
        in_specs=[pl.BlockSpec((1, lane_tile), lambda i: (0, i))],
        out_specs=pl.BlockSpec((1, lane_tile), lambda i: (0, i)),
        compiler_params=_compiler_params(),
    )(x2d)
    return out2d.reshape(n)


def swish(x, *, tile_rows=None):
    """Elementwise swish: sigmoid(x) * x.  Accepts any shape, floating dtype."""
    orig_shape = x.shape
    orig_dtype = x.dtype
    if not jnp.issubdtype(orig_dtype, jnp.floating):
        raise TypeError(f"swish expects a floating dtype, got {orig_dtype}")
    n = x.size
    if n == 0:
        return x

    x_flat = x.reshape(-1)  # contiguous reshape: a bitcast, not an HBM pass

    if n % LANES != 0:
        return _swish_tail(x_flat).reshape(orig_shape)

    rows = n // LANES
    x2d = x_flat.reshape(rows, LANES)

    itemsize = jnp.dtype(orig_dtype).itemsize
    sub = _sublane_min(orig_dtype)

    # Largest tile that fits the per-block VMEM budget, a multiple of the sublane min,
    # clamped to the actual array extent (tiny activations get tiny blocks).
    max_tile_rows = max(sub, (_BLOCK_BYTES // (LANES * itemsize)) // sub * sub)
    if tile_rows is None:
        tile_rows = max_tile_rows
    tile_rows = max(sub, min(tile_rows, max_tile_rows, _round_up(rows, sub)) // sub * sub)

    # Never force-split a single-block tensor (pure per-step overhead on 1-TC chips).
    # If the tensor naturally needs 2-3 steps, re-tile to >=4 steps so a dual-TC chip
    # (v7x megacore sharding via "parallel") gets >=2 steps per core and keeps the
    # DMA pipeline overlapped; blocks stay MiB-scale so this is ~free elsewhere.
    steps = pl.cdiv(rows, tile_rows)
    if 2 <= steps < 4:
        tile_rows = max(sub, _round_up(pl.cdiv(rows, 4), sub))

    out2d = _swish_2d(x2d, tile_rows)
    return out2d.reshape(orig_shape)


if __name__ == "__main__":
    key = jax.random.PRNGKey(0)

    # NCHW input, small shape consistent with a conv-net activation.
    x = jax.random.normal(key, (2, 4, 16, 16), dtype=jnp.float32)
    y = jax.block_until_ready(swish(x))
    y_ref = jax.nn.sigmoid(x) * x
    assert y.shape == x.shape and y.dtype == x.dtype
    assert jnp.allclose(y, y_ref, atol=1e-5, rtol=1e-5)

    # Lane-remainder path (n % 128 != 0) — no pad/slice, masked partial lane block.
    k1, k2, k3, k4 = jax.random.split(key, 4)
    x2 = jax.random.normal(k1, (3, 5, 7), dtype=jnp.float32)
    y2 = jax.block_until_ready(swish(x2))
    assert jnp.allclose(y2, jax.nn.sigmoid(x2) * x2, atol=1e-5, rtol=1e-5)

    # bf16 path (single-transcendental sigmoid).
    x3 = jax.random.normal(k2, (2, 4, 16, 16), dtype=jnp.bfloat16)
    y3 = jax.block_until_ready(swish(x3))
    ref3 = (jax.nn.sigmoid(x3.astype(jnp.float32)) * x3.astype(jnp.float32)).astype(jnp.bfloat16)
    assert y3.dtype == jnp.bfloat16
    assert jnp.allclose(y3.astype(jnp.float32), ref3.astype(jnp.float32), atol=2e-2, rtol=2e-2)

    # Multi-step grid (explicit tile_rows override) — exercises >1 grid step.
    x4 = jax.random.normal(k3, (2, 4, 16, 16), dtype=jnp.float32)
    y4 = jax.block_until_ready(swish(x4, tile_rows=8))
    assert jnp.allclose(y4, jax.nn.sigmoid(x4) * x4, atol=1e-5, rtol=1e-5)

    # Block rows > array rows (rows=5, block rows=8) — partial sublane block masking.
    x5 = jax.random.normal(k4, (1, 4, 10, 16), dtype=jnp.float32)
    y5 = jax.block_until_ready(swish(x5))
    assert jnp.allclose(y5, jax.nn.sigmoid(x5) * x5, atol=1e-5, rtol=1e-5)

    print("KERNEL_OK")
</pallas_src>

<mosaic_0001>
module attributes {stable_mosaic.version = 11 : i64} {
  func.func @_swish_kernel(%arg0: i32, %arg1: memref<16x128xf32, #tpu.memory_space<vmem>>, %arg2: memref<16x128xf32, #tpu.memory_space<vmem>>) attributes {dimension_semantics = [#tpu.dimension_semantics<parallel>], iteration_bounds = array<i64: 1>, scalar_prefetch = 0 : i64, scratch_operands = 0 : i64, tpu.core_type = #tpu.core_type<tc>, window_params = [{transform_indices = @transform_0, window_bounds = array<i64: 16, 128>}, {transform_indices = @transform_1, window_bounds = array<i64: 16, 128>}]} {
    %c0 = arith.constant 0 : index
    %c0_0 = arith.constant 0 : index
    %0 = vector.load %arg1[%c0, %c0_0] : memref<16x128xf32, #tpu.memory_space<vmem>>, vector<16x128xf32>
    %cst = arith.constant 5.000000e-01 : f32
    %1 = vector.broadcast %cst : f32 to vector<16x128xf32>
    %2 = arith.mulf %1, %0 : vector<16x128xf32>
    %3 = math.tanh %2 : vector<16x128xf32>
    %cst_1 = arith.constant 1.000000e+00 : f32
    %4 = vector.broadcast %cst_1 : f32 to vector<16x128xf32>
    %5 = arith.addf %3, %4 : vector<16x128xf32>
    %cst_2 = arith.constant 5.000000e-01 : f32
    %6 = vector.broadcast %cst_2 : f32 to vector<16x128xf32>
    %7 = arith.mulf %6, %5 : vector<16x128xf32>
    %8 = arith.mulf %0, %7 : vector<16x128xf32>
    %c0_3 = arith.constant 0 : index
    %c0_4 = arith.constant 0 : index
    %9 = vector.load %arg2[%c0_3, %c0_4] : memref<16x128xf32, #tpu.memory_space<vmem>>, vector<16x128xf32>
    tpu.vector_store %arg2[%c0_3, %c0_4], %8 {strides = array<i32>} : memref<16x128xf32, #tpu.memory_space<vmem>>, vector<16x128xf32>,
    return
  }
  func.func @transform_0(%arg0: i32) -> (i32, i32) {
    %c0_i32 = arith.constant 0 : i32
    %c0_i32_0 = arith.constant 0 : i32
    return %arg0, %c0_i32 : i32, i32
  }
  func.func @transform_1(%arg0: i32) -> (i32, i32) {
    %c0_i32 = arith.constant 0 : i32
    %c0_i32_0 = arith.constant 0 : i32
    return %arg0, %c0_i32 : i32, i32
  }
}

</mosaic_0001>

<llo_original>
// kernel: tpu_custom_call.1
$region0: #{tpu_custom_call.1}
  #allocation0 [shape = 'u32[]', space=smem, size = 0x4, offset = 0x4, fixed_abs, tag = 'smem constant byte address 0x4 - core index']
  #allocation1 [shape = 'u32[72,128]{1,0:T(1,128)}', space=vmem, size = 0x9000, scoped, tag = 'internal scratch']
  %s0 = inlined_call_operand.hbm [shape: f32[16,128], index: 0, kind: input, shape index: {}]
  %s1 = inlined_call_operand.hbm [shape: f32[16,128], index: 1, kind: output, shape index: {}]
  %s2 = sld [smem:[#allocation0]]
  $region18: #{tpu_custom_call.1} parent=0
    _
  %s4 = ssub.s32 1, %s2
  %s5 = scalar_select 0, %s4, %s2
  $region1: #{tpu_custom_call.1} parent=0
    #allocation2 [shape = 'u8[8192]{0}', space=vmem, size = 0x2000, scoped, tag = 'input window, operand 0, single buffered']
    #allocation3 [shape = 's32[1]{0}', space=sflag, size = 0x4, scoped, tag = 'scoped memory for tpu_custom_call.1']
    #allocation4 [shape = 's32[1]{0}', space=sflag, size = 0x4, scoped, tag = 'scoped memory for tpu_custom_call.1']
    #allocation5 [shape = 'u8[8192]{0}', space=vmem, size = 0x2000, scoped, tag = 'output window, operand 0, single buffered']
    %6 = vsyncpa [#allocation3], 0
    %7 = vsyncpa [#allocation4], 0
    // Predicated region
    $region2: #{tpu_custom_call.1} parent=1 // pred_check
      _
    $region3: #{tpu_custom_call.1} parent=1 // pred_check_branch
      %9 = sbr.rel (0) target = $region5
    $region4: #{tpu_custom_call.1} parent=1 // pred_region
      %11 = vsyncadd [#allocation3], 0
      %s12 = sshll.u32 %s0, 4
      %s13 = int_to_ptr.hbm [resolvable:$true] %s12
      %s14 = sshll.u32 [#allocation2], 4
      %s15 = int_to_ptr.vmem [resolvable:$true] %s14
      %20 = dma.hbm_to_vmem [thread:$0]  %s13, 256, %s15, [#allocation3], 128, 128, 8
    $region5: #{tpu_custom_call.1} parent=1 // pred_fallthru
      _
    // Predicated region
    $region6: #{tpu_custom_call.1} parent=1 // pred_check
      _
    $region7: #{tpu_custom_call.1} parent=1 // pred_check_branch
      %22 = sbr.rel (0) target = $region9
    $region8: #{tpu_custom_call.1} parent=1 // pred_region
      %24 = dma.done [#allocation3], 256
    $region9: #{tpu_custom_call.1} parent=1 // pred_fallthru
      _
    %v25 = vld [vmem:[#allocation2] sm:$0xff]
    %v26 = vld [vmem:[#allocation2 + $0x8] sm:$0xff]
    %v27 = vmul.f32 %v25, 0.5
    %v28 = vmul.f32 %v26, 0.5
    %v29 = vtanh.pop %v27
    %v30 = vtanh.pop %v28
    %v31 = vadd.f32 %v29, 1.0
    %v32 = vadd.f32 %v30, 1.0
    %v33 = vmul.f32 %v31, 0.5
    %v34 = vmul.f32 %v32, 0.5
    %v35 = vmul.f32 %v25, %v33
    %v36 = vmul.f32 %v26, %v34
    %37 = vst [vmem:[#allocation5] sm:$0xff] %v35
    %38 = vst [vmem:[#allocation5 + $0x8] sm:$0xff] %v36
    // Predicated region
    $region10: #{tpu_custom_call.1} parent=1 // pred_check
      _
    $region11: #{tpu_custom_call.1} parent=1 // pred_check_branch
      %40 = sbr.rel (0) target = $region13
    $region12: #{tpu_custom_call.1} parent=1 // pred_region
      %42 = vsyncadd [#allocation4], 0
      %s43 = sshll.u32 [#allocation5], 4
      %s44 = int_to_ptr.vmem [resolvable:$true] %s43
      %s45 = sshll.u32 %s1, 4
      %s46 = int_to_ptr.hbm [resolvable:$true] %s45
      %51 = dma.vmem_to_hbm [thread:$0]  %s44, 256, %s46, [#allocation4], 128, 128, 8
    $region13: #{tpu_custom_call.1} parent=1 // pred_fallthru
      _
    // Predicated region
    $region14: #{tpu_custom_call.1} parent=1 // pred_check
      _
    $region15: #{tpu_custom_call.1} parent=1 // pred_check_branch
      %53 = sbr.rel (0) target = $region17
    $region16: #{tpu_custom_call.1} parent=1 // pred_region
      %55 = dma.done [#allocation4], 256
    $region17: #{tpu_custom_call.1} parent=1 // pred_fallthru
      _
    %56 = vsyncpa [#allocation3], 1
    %57 = vsyncpa [#allocation4], 1

</llo_original>
